<compile_context>
chip_gen: v5e
topology: v5e:2x2
jax: 0.10.0
libtpu: 0.0.40
codegen_flags: <defaults>
</compile_context>

<pallas_src>
from functools import partial

import jax
import jax.numpy as jnp
from jax.experimental import pallas as pl
from jax.experimental.pallas import tpu as pltpu


def _tsel_kernel(x_ref,                     # (B*k, D) f32 selected token feats
                 negm_ref,                  # (B*k, 1) f32 additive length mask
                 wcat_ref, bcat_ref,        # fused fc|mlp0 weights (D, Ep) bf16, bias (1, Ep) f32
                 scale_ref, shift_ref,      # folded BatchNorm1d(H): (1, H) f32 each
                 w2_ref, b2_ref,            # mlp1: (H, E) bf16, (1, E) f32
                 o_ref,                     # (B, E) f32 output
                 *, nb, nk, ne, nh):
    x = x_ref[...]                          # (nb*nk, D) f32
    # l2norm over the feature dim.  rsqrt keeps the sqrt/div on the EUP slot; the eps
    # placement differs from the reference's (sqrt(s)+1e-8) by far less than bf16 eps.
    ssq = jnp.sum(x * x, axis=-1, keepdims=True)
    xh = (x * jax.lax.rsqrt(ssq + 1e-12)).astype(jnp.bfloat16)   # torch .half() -> bf16

    # One MXU matmul covers both fc: Linear(D->E) and MLP layer 0: Linear(D->H).
    z = jnp.dot(xh, wcat_ref[...], preferred_element_type=jnp.float32) + bcat_ref[...]
    fc = z[:, :ne]                          # (nb*nk, E)  fc branch
    h = z[:, ne:ne + nh]                    # (nb*nk, H)  MLP layer 0 pre-BN

    # Folded BatchNorm1d (eval) + ReLU, then MLP layer 1: Linear(H->E).
    h = jnp.maximum(h * scale_ref[...] + shift_ref[...], 0.0).astype(jnp.bfloat16)
    cap = jnp.dot(h, w2_ref[...], preferred_element_type=jnp.float32) + b2_ref[...]

    # Residual add + additive length mask (0 for valid rows, -FLT_MAX for padded).
    local = fc + cap + negm_ref[...]        # (nb*nk, E) f32

    # maxk_pool1d_var with k=1: per-batch max over the first `length` kept tokens.
    # Static unroll over the (small) batch keeps the segment max reshape-free.
    pooled = [jnp.max(local[b * nk:(b + 1) * nk, :], axis=0, keepdims=True)
              for b in range(nb)]
    o_ref[...] = jnp.concatenate(pooled, axis=0)


def texual_selected_embedding(text_feats, text, attenscore, params, ratio=0.5):
    """text_feats: (B, L, D) f32; text: (B, L) int32; attenscore: (B, L, L) f32."""
    B, L, D = text_feats.shape
    E = params["fc_w"].shape[1]
    H = params["w1"].shape[1]
    k = int((L - 2) * ratio)

    # ---- plain-JAX glue: token selection (mirrors the PyTorch indexing code) ----
    mask = (text != 0).astype(jnp.int32)                       # (B, L)
    lengths = jnp.sum(mask, axis=1) - 2                        # (B,)
    amax = jnp.argmax(text, axis=-1)                           # (B,)

    lane = jnp.arange(L)
    col_mask = (lane[None, :] == amax[:, None]) | (lane[None, :] == 0)     # (B, L)
    att = jnp.where(col_mask[:, None, :], -1.0, attenscore)               # (B, L, L)
    row = jnp.take_along_axis(att, amax[:, None, None], axis=1)[:, 0, :]  # (B, L)
    row = row * mask.astype(row.dtype)

    # TODO(synk): top-k + gather stay in plain JAX (no clean Pallas top-k on TPU).
    _, top_idx = jax.lax.top_k(row, k)                                    # (B, k)
    base = jnp.take_along_axis(text_feats, top_idx[:, :, None], axis=1)   # (B, k, D)
    x_flat = base.reshape(B * k, D)                                       # (B*k, D)

    # lengths = min(lengths, k); clamp to >= 1 (the PyTorch reference is undefined
    # for length <= 0).
    lengths = jnp.clip(lengths, 1, k).astype(jnp.int32)
    valid = jnp.arange(k)[None, :] < lengths[:, None]                     # (B, k)
    negm = jnp.where(valid, 0.0, jnp.finfo(jnp.float32).min)
    negm = negm.reshape(B * k, 1).astype(jnp.float32)

    # ---- grid-invariant operand preprocessing (done once, outside the kernel) ----
    Ep = ((E + H + 127) // 128) * 128          # pad fused RHS to full 128-lane groups
    w_cat = jnp.concatenate([params["fc_w"], params["w1"]], axis=1)        # (D, E+H)
    w_cat = jnp.pad(w_cat, ((0, 0), (0, Ep - (E + H)))).astype(jnp.bfloat16)
    b_cat = jnp.concatenate([params["fc_b"], params["b1"]], axis=1)
    b_cat = jnp.pad(b_cat, ((0, 0), (0, Ep - (E + H)))).astype(jnp.float32)
    bn_scale = params["bn_g"] * jax.lax.rsqrt(params["bn_v"] + 1e-5)       # (1, H)
    bn_shift = params["bn_b"] - params["bn_m"] * bn_scale                  # (1, H)
    w2 = params["w2"].astype(jnp.bfloat16)                                 # (H, E)
    b2 = params["b2"].astype(jnp.float32)                                  # (1, E)

    # ---- Pallas kernel: one fused step over the whole (B*k, D) slab ----
    vmem = pl.BlockSpec(memory_space=pltpu.MemorySpace.VMEM)
    out = pl.pallas_call(
        partial(_tsel_kernel, nb=B, nk=k, ne=E, nh=H),
        out_shape=jax.ShapeDtypeStruct((B, E), jnp.float32),
        in_specs=[vmem] * 8,
        out_specs=vmem,
    )(x_flat, negm, w_cat, b_cat, bn_scale, bn_shift, w2, b2)

    return out                                                            # (B, E) f32


def init_params(key, D, E, H):
    ks = jax.random.split(key, 6)
    s = 0.05
    return dict(
        fc_w=jax.random.normal(ks[0], (D, E), jnp.float32) * s,
        fc_b=jax.random.normal(ks[1], (1, E), jnp.float32) * s,
        w1=jax.random.normal(ks[2], (D, H), jnp.float32) * s,
        b1=jax.random.normal(ks[3], (1, H), jnp.float32) * s,
        bn_g=jnp.ones((1, H), jnp.float32),
        bn_b=jnp.zeros((1, H), jnp.float32),
        bn_m=jnp.zeros((1, H), jnp.float32),
        bn_v=jnp.ones((1, H), jnp.float32),
        w2=jax.random.normal(ks[4], (H, E), jnp.float32) * s,
        b2=jax.random.normal(ks[5], (1, E), jnp.float32) * s,
    )


if __name__ == "__main__":
    # Small shapes consistent with the module: input_dim=D=32, embed_dim=E=64,
    # hidden=H=32, seq L=10, ratio=0.5 -> k = int((10-2)*0.5) = 4.
    B, L, D, E = 2, 10, 32, 64
    H = E // 2
    key = jax.random.PRNGKey(0)
    k_text, k_feat, k_att, k_par = jax.random.split(key, 4)

    valid = jnp.array([8, 6])                                   # >= 3 nonzero tokens/row
    text = jax.random.randint(k_text, (B, L), 1, 50, dtype=jnp.int32)
    text = jnp.where(jnp.arange(L)[None, :] < valid[:, None], text, 0)
    text_feats = jax.random.normal(k_feat, (B, L, D), jnp.float32)
    attenscore = jax.random.normal(k_att, (B, L, L), jnp.float32)

    params = init_params(k_par, D, E, H)

    out = texual_selected_embedding(text_feats, text, attenscore, params, ratio=0.5)
    jax.block_until_ready(out)
    assert out.shape == (B, E) and out.dtype == jnp.float32
    print("KERNEL_OK")
</pallas_src>

<mosaic_0001>
module attributes {stable_mosaic.version = 11 : i64} {
  func.func @_tsel_kernel(%arg0: memref<8x32xf32, #tpu.memory_space<vmem>>, %arg1: memref<8x1xf32, #tpu.memory_space<vmem>>, %arg2: memref<32x128xbf16, #tpu.memory_space<vmem>>, %arg3: memref<1x128xf32, #tpu.memory_space<vmem>>, %arg4: memref<1x32xf32, #tpu.memory_space<vmem>>, %arg5: memref<1x32xf32, #tpu.memory_space<vmem>>, %arg6: memref<32x64xbf16, #tpu.memory_space<vmem>>, %arg7: memref<1x64xf32, #tpu.memory_space<vmem>>, %arg8: memref<2x64xf32, #tpu.memory_space<vmem>>) attributes {dimension_semantics = [], scalar_prefetch = 0 : i64, scratch_operands = 0 : i64, tpu.core_type = #tpu.core_type<tc>} {
    %c0 = arith.constant 0 : index
    %c0_0 = arith.constant 0 : index
    %0 = vector.load %arg0[%c0, %c0_0] : memref<8x32xf32, #tpu.memory_space<vmem>>, vector<8x32xf32>
    %1 = arith.mulf %0, %0 : vector<8x32xf32>
    %cst = arith.constant dense<0.000000e+00> : vector<8xf32>
    %2 = vector.multi_reduction <add>, %1, %cst [1] : vector<8x32xf32> to vector<8xf32>
    %3 = vector.shape_cast %2 : vector<8xf32> to vector<8x1xf32>
    %cst_1 = arith.constant 9.99999996E-13 : f32
    %4 = vector.broadcast %cst_1 : f32 to vector<8x1xf32>
    %5 = arith.addf %3, %4 : vector<8x1xf32>
    %6 = math.rsqrt %5 : vector<8x1xf32>
    %7 = vector.broadcast %6 : vector<8x1xf32> to vector<8x32xf32>
    %8 = arith.mulf %0, %7 : vector<8x32xf32>
    %9 = arith.truncf %8 : vector<8x32xf32> to vector<8x32xbf16>
    %c0_2 = arith.constant 0 : index
    %c0_3 = arith.constant 0 : index
    %10 = vector.load %arg2[%c0_2, %c0_3] : memref<32x128xbf16, #tpu.memory_space<vmem>>, vector<32x128xbf16>
    %cst_4 = arith.constant dense<0.000000e+00> : vector<8x128xf32>
    %11 = tpu.matmul %9, %10, %cst_4 {dimension_numbers = #tpu.dot_dimension_numbers<[1], [0], [0], [1], [0, 0, 1, 1], [], []>} : vector<8x32xbf16>, vector<32x128xbf16>, vector<8x128xf32> -> vector<8x128xf32>
    %c0_5 = arith.constant 0 : index
    %c0_6 = arith.constant 0 : index
    %12 = vector.load %arg3[%c0_5, %c0_6] : memref<1x128xf32, #tpu.memory_space<vmem>>, vector<1x128xf32>
    %13 = vector.broadcast %12 : vector<1x128xf32> to vector<8x128xf32>
    %14 = arith.addf %11, %13 : vector<8x128xf32>
    %15 = vector.extract_strided_slice %14 {offsets = [0, 0], sizes = [8, 64], strides = [1, 1]} : vector<8x128xf32> to vector<8x64xf32>
    %16 = vector.extract_strided_slice %14 {offsets = [0, 64], sizes = [8, 32], strides = [1, 1]} : vector<8x128xf32> to vector<8x32xf32>
    %c0_7 = arith.constant 0 : index
    %c0_8 = arith.constant 0 : index
    %17 = vector.load %arg4[%c0_7, %c0_8] : memref<1x32xf32, #tpu.memory_space<vmem>>, vector<1x32xf32>
    %18 = vector.broadcast %17 : vector<1x32xf32> to vector<8x32xf32>
    %19 = arith.mulf %16, %18 : vector<8x32xf32>
    %c0_9 = arith.constant 0 : index
    %c0_10 = arith.constant 0 : index
    %20 = vector.load %arg5[%c0_9, %c0_10] : memref<1x32xf32, #tpu.memory_space<vmem>>, vector<1x32xf32>
    %21 = vector.broadcast %20 : vector<1x32xf32> to vector<8x32xf32>
    %22 = arith.addf %19, %21 : vector<8x32xf32>
    %cst_11 = arith.constant 0.000000e+00 : f32
    %23 = vector.broadcast %cst_11 : f32 to vector<8x32xf32>
    %24 = arith.maximumf %22, %23 : vector<8x32xf32>
    %25 = arith.truncf %24 : vector<8x32xf32> to vector<8x32xbf16>
    %c0_12 = arith.constant 0 : index
    %c0_13 = arith.constant 0 : index
    %26 = vector.load %arg6[%c0_12, %c0_13] : memref<32x64xbf16, #tpu.memory_space<vmem>>, vector<32x64xbf16>
    %cst_14 = arith.constant dense<0.000000e+00> : vector<8x64xf32>
    %27 = tpu.matmul %25, %26, %cst_14 {dimension_numbers = #tpu.dot_dimension_numbers<[1], [0], [0], [1], [0, 0, 1, 1], [], []>} : vector<8x32xbf16>, vector<32x64xbf16>, vector<8x64xf32> -> vector<8x64xf32>
    %c0_15 = arith.constant 0 : index
    %c0_16 = arith.constant 0 : index
    %28 = vector.load %arg7[%c0_15, %c0_16] : memref<1x64xf32, #tpu.memory_space<vmem>>, vector<1x64xf32>
    %29 = vector.broadcast %28 : vector<1x64xf32> to vector<8x64xf32>
    %30 = arith.addf %27, %29 : vector<8x64xf32>
    %31 = arith.addf %15, %30 : vector<8x64xf32>
    %c0_17 = arith.constant 0 : index
    %c0_18 = arith.constant 0 : index
    %32 = vector.load %arg1[%c0_17, %c0_18] : memref<8x1xf32, #tpu.memory_space<vmem>>, vector<8x1xf32>
    %33 = vector.broadcast %32 : vector<8x1xf32> to vector<8x64xf32>
    %34 = arith.addf %31, %33 : vector<8x64xf32>
    %35 = vector.extract_strided_slice %34 {offsets = [0, 0], sizes = [4, 64], strides = [1, 1]} : vector<8x64xf32> to vector<4x64xf32>
    %cst_19 = arith.constant dense<0xFF800000> : vector<64xf32>
    %36 = vector.multi_reduction <maximumf>, %35, %cst_19 [0] : vector<4x64xf32> to vector<64xf32>
    %37 = vector.shape_cast %36 : vector<64xf32> to vector<1x64xf32>
    %38 = vector.extract_strided_slice %34 {offsets = [4, 0], sizes = [4, 64], strides = [1, 1]} : vector<8x64xf32> to vector<4x64xf32>
    %cst_20 = arith.constant dense<0xFF800000> : vector<64xf32>
    %39 = vector.multi_reduction <maximumf>, %38, %cst_20 [0] : vector<4x64xf32> to vector<64xf32>
    %40 = vector.shape_cast %39 : vector<64xf32> to vector<1x64xf32>
    %41 = tpu.concatenate %37, %40 in 0 : vector<1x64xf32>, vector<1x64xf32> -> vector<2x64xf32>
    %c0_21 = arith.constant 0 : index
    %c0_22 = arith.constant 0 : index
    %42 = vector.load %arg8[%c0_21, %c0_22] : memref<2x64xf32, #tpu.memory_space<vmem>>, vector<2x64xf32>
    tpu.vector_store %arg8[%c0_21, %c0_22], %41 {strides = array<i32>} : memref<2x64xf32, #tpu.memory_space<vmem>>, vector<2x64xf32>,
    return
  }
}

</mosaic_0001>

<llo_original>
// kernel: tpu_custom_call.1
$region0: #{tpu_custom_call.1}
  #allocation0 [shape = 'u32[]', space=smem, size = 0x4, offset = 0x4, fixed_abs, tag = 'smem constant byte address 0x4 - core index']
  #allocation1 [shape = 'u32[72,128]{1,0:T(1,128)}', space=vmem, size = 0x9000, scoped, tag = 'internal scratch']
  %s0 = inlined_call_operand.vmem [shape: f32[8,32], index: 0, kind: input, shape index: {}]
  %s1 = inlined_call_operand.vmem [shape: f32[8,1], index: 1, kind: input, shape index: {}]
  %s2 = inlined_call_operand.hbm [shape: bf16[32,128], index: 2, kind: input, shape index: {}]
  %s3 = inlined_call_operand.vmem [shape: f32[1,128], index: 3, kind: input, shape index: {}]
  %s4 = inlined_call_operand.vmem [shape: f32[1,32], index: 4, kind: input, shape index: {}]
  %s5 = inlined_call_operand.vmem [shape: f32[1,32], index: 5, kind: input, shape index: {}]
  %s6 = inlined_call_operand.hbm [shape: bf16[32,64], index: 6, kind: input, shape index: {}]
  %s7 = inlined_call_operand.vmem [shape: f32[1,64], index: 7, kind: input, shape index: {}]
  %s8 = inlined_call_operand.hbm [shape: f32[2,64], index: 8, kind: output, shape index: {}]
  %s9 = sld [smem:[#allocation0]]
  $region50: #{tpu_custom_call.1} parent=0
    _
  %s11 = ssub.s32 1, %s9
  %s12 = scalar_select 0, %s11, %s9
  $region1: #{tpu_custom_call.1} parent=0
    #allocation2 [shape = 'u8[8192]{0}', space=vmem, size = 0x2000, scoped, tag = 'input window, operand 2, single buffered']
    #allocation3 [shape = 's32[1]{0}', space=sflag, size = 0x4, scoped, tag = 'scoped memory for tpu_custom_call.1']
    #allocation4 [shape = 's32[1]{0}', space=sflag, size = 0x4, scoped, tag = 'scoped memory for tpu_custom_call.1']
    #allocation5 [shape = 'u8[8192]{0}', space=vmem, size = 0x2000, scoped, tag = 'input window, operand 6, single buffered']
    #allocation6 [shape = 's32[1]{0}', space=sflag, size = 0x4, scoped, tag = 'scoped memory for tpu_custom_call.1']
    #allocation7 [shape = 'u8[1024]{0}', space=vmem, size = 0x400, scoped, tag = 'output window, operand 0, single buffered']
    %13 = vsyncpa [#allocation3], 0
    %14 = vsyncpa [#allocation6], 0
    %15 = vsyncpa [#allocation4], 0
    // Predicated region
    $region2: #{tpu_custom_call.1} parent=1 // pred_check
      _
    $region3: #{tpu_custom_call.1} parent=1 // pred_check_branch
      %17 = sbr.rel (0) target = $region5
    $region4: #{tpu_custom_call.1} parent=1 // pred_region
      _
    $region5: #{tpu_custom_call.1} parent=1 // pred_fallthru
      _
    // Predicated region
    $region6: #{tpu_custom_call.1} parent=1 // pred_check
      _
    $region7: #{tpu_custom_call.1} parent=1 // pred_check_branch
      %19 = sbr.rel (0) target = $region9
    $region8: #{tpu_custom_call.1} parent=1 // pred_region
      _
    $region9: #{tpu_custom_call.1} parent=1 // pred_fallthru
      _
    // Predicated region
    $region10: #{tpu_custom_call.1} parent=1 // pred_check
      _
    $region11: #{tpu_custom_call.1} parent=1 // pred_check_branch
      %21 = sbr.rel (0) target = $region13
    $region12: #{tpu_custom_call.1} parent=1 // pred_region
      %23 = vsyncadd [#allocation3], 0
      %s24 = sshll.u32 %s2, 4
      %s25 = int_to_ptr.hbm [resolvable:$true] %s24
      %s26 = sshll.u32 [#allocation2], 4
      %s27 = int_to_ptr.vmem [resolvable:$true] %s26
      %32 = dma.hbm_to_vmem [thread:$0]  %s25, 256, %s27, [#allocation3], 64, 64, 4
    $region13: #{tpu_custom_call.1} parent=1 // pred_fallthru
      _
    // Predicated region
    $region14: #{tpu_custom_call.1} parent=1 // pred_check
      _
    $region15: #{tpu_custom_call.1} parent=1 // pred_check_branch
      %34 = sbr.rel (0) target = $region17
    $region16: #{tpu_custom_call.1} parent=1 // pred_region
      _
    $region17: #{tpu_custom_call.1} parent=1 // pred_fallthru
      _
    // Predicated region
    $region18: #{tpu_custom_call.1} parent=1 // pred_check
      _
    $region19: #{tpu_custom_call.1} parent=1 // pred_check_branch
      %36 = sbr.rel (0) target = $region21
    $region20: #{tpu_custom_call.1} parent=1 // pred_region
      _
    $region21: #{tpu_custom_call.1} parent=1 // pred_fallthru
      _
    // Predicated region
    $region22: #{tpu_custom_call.1} parent=1 // pred_check
      _
    $region23: #{tpu_custom_call.1} parent=1 // pred_check_branch
      %38 = sbr.rel (0) target = $region25
    $region24: #{tpu_custom_call.1} parent=1 // pred_region
      _
    $region25: #{tpu_custom_call.1} parent=1 // pred_fallthru
      _
    // Predicated region
    $region26: #{tpu_custom_call.1} parent=1 // pred_check
      _
    $region27: #{tpu_custom_call.1} parent=1 // pred_check_branch
      %40 = sbr.rel (0) target = $region29
    $region28: #{tpu_custom_call.1} parent=1 // pred_region
      %42 = vsyncadd [#allocation6], 0
      %s43 = sshll.u32 %s6, 4
      %s44 = int_to_ptr.hbm [resolvable:$true] %s43
      %s45 = sshll.u32 [#allocation5], 4
      %s46 = int_to_ptr.vmem [resolvable:$true] %s45
      %51 = dma.hbm_to_vmem [thread:$0]  %s44, 256, %s46, [#allocation6], 64, 64, 4
    $region29: #{tpu_custom_call.1} parent=1 // pred_fallthru
      _
    // Predicated region
    $region30: #{tpu_custom_call.1} parent=1 // pred_check
      _
    $region31: #{tpu_custom_call.1} parent=1 // pred_check_branch
      %53 = sbr.rel (0) target = $region33
    $region32: #{tpu_custom_call.1} parent=1 // pred_region
      _
    $region33: #{tpu_custom_call.1} parent=1 // pred_fallthru
      _
    // Predicated region
    $region34: #{tpu_custom_call.1} parent=1 // pred_check
      _
    $region35: #{tpu_custom_call.1} parent=1 // pred_check_branch
      %55 = sbr.rel (0) target = $region37
    $region36: #{tpu_custom_call.1} parent=1 // pred_region
      %57 = dma.done [#allocation3], 256
    $region37: #{tpu_custom_call.1} parent=1 // pred_fallthru
      _
    // Predicated region
    $region38: #{tpu_custom_call.1} parent=1 // pred_check
      _
    $region39: #{tpu_custom_call.1} parent=1 // pred_check_branch
      %59 = sbr.rel (0) target = $region41
    $region40: #{tpu_custom_call.1} parent=1 // pred_region
      %61 = dma.done [#allocation6], 256
    $region41: #{tpu_custom_call.1} parent=1 // pred_fallthru
      _
    %v63 = vld [vmem:[%s0] sm:$0xff]
    %v64 = vmul.f32 %v63, %v63
    %vm65 = vcmask 261120
    %v66 = vsel %vm65, %v64, 0.0
    %67 = vadd.xlane.f32.xlu0 %v66
    %v68 = vpop.xlane.xlu0 %67
    %v69 = vadd.f32 %v68, 1e-12
    %v70 = vrsqrt.pop %v69
    %v71 = vmul.f32 %v70, %v69
    %v72 = vmul.f32 %v71, %v70
    %v73 = vmul.f32 0.5, %v72
    %v74 = vsub.f32 1.5, %v73
    %v75 = vmul.f32 %v70, %v74
    %vm76 = vweird.f32 %v69
    %vm77 = vweird.f32 %v70
    %vm78 = vmor %vm76, %vm77
    %v79 = vsel %vm78, %v70, %v75
    %v80 = vmul.f32 %v63, %v79
    %v81 = vpack.c.bf16 %v80, %v80
    %v82 = vld [vmem:[#allocation2] sm:$0xf]
    %v83 = vld [vmem:[#allocation2 + $0x4] sm:$0xf]
    %v84 = vld [vmem:[#allocation2 + $0x8] sm:$0xf]
    %v85 = vld [vmem:[#allocation2 + $0xc] sm:$0xf]
    %v86 = vld [vmem:[%s3] sm:$0x1]
    %v88 = vperm.slane %v86, 0
    %v94 = vunpack.c.l.b16 %v82
    %v95 = vunpack.c.l.b16 %v83
    %v96 = vunpack.c.l.b16 %v84
    %v97 = vunpack.c.l.b16 %v85
    %v98 = vpack.c.b16 %v95, %v94
    %v99 = vpack.c.b16 %v97, %v96
    %v103 = vsel %vm65, %v81, 0
    %105 = vmatpush.bf16.msra.mxu0 0
    %106 = vmatpush.bf16.msra.mxu0 0
    %107 = vmatpush.bf16.msra.mxu0 0
    %108 = vmatpush.bf16.msra.mxu0 0
    %109 = vmatpush.bf16.msra.mxu0 0
    %110 = vmatpush.bf16.msra.mxu0 0
    %111 = vmatpush.bf16.msra.mxu0 %v99
    %112 = vmatpush.bf16.msra.mxu0 %v98
    %113 = vmatmul.bf16.gmra.mxu0 %v103
    %v114 = vpop.f32.mrf.mxu0
    %v115 = vadd.f32 %v88, %v114
    %v116 = vpop.f32.mrf.mxu0
    %117 = vdwg.mxu0
    %v118 = vld [vmem:[%s4] sm:$0x1]
    %v120 = vperm.slane %v118, 0
    %121 = vrot.lane.b32.xlu0 %v120, 64
    %v122 = vpop.permute.xlu0 %121
    %v124 = vmul.f32 %v115, %v122
    %v125 = vld [vmem:[%s5] sm:$0x1]
    %v127 = vperm.slane %v125, 0
    %128 = vrot.lane.b32.xlu0 %v127, 64
    %v129 = vpop.permute.xlu0 %128
    %v131 = vadd.f32 %v124, %v129
    %v132 = vmax.f32 %v131, 0.0
    %v133 = vpack.c.bf16 %v132, %v132
    %v134 = vld [vmem:[#allocation5] sm:$0xf]
    %v135 = vld [vmem:[#allocation5 + $0x4] sm:$0xf]
    %v136 = vld [vmem:[#allocation5 + $0x8] sm:$0xf]
    %v137 = vld [vmem:[#allocation5 + $0xc] sm:$0xf]
    %v138 = vld [vmem:[%s7] sm:$0x1]
    %v140 = vperm.slane %v138, 0
    %143 = vrot.lane.b32.xlu0 %v133, 64
    %v144 = vpop.permute.xlu0 %143
    %v149 = vunpack.c.l.b16 %v134
    %v150 = vunpack.c.l.b16 %v135
    %v151 = vunpack.c.l.b16 %v136
    %v152 = vunpack.c.l.b16 %v137
    %v153 = vpack.c.b16 %v150, %v149
    %v154 = vpack.c.b16 %v152, %v151
    %v158 = vsel %vm65, %v144, 0
    %160 = vmatpush.bf16.msra.mxu0 0
    %161 = vmatpush.bf16.msra.mxu0 0
    %162 = vmatpush.bf16.msra.mxu0 0
    %163 = vmatpush.bf16.msra.mxu0 0
    %164 = vmatpush.bf16.msra.mxu0 0
    %165 = vmatpush.bf16.msra.mxu0 0
    %166 = vmatpush.bf16.msra.mxu0 %v154
    %167 = vmatpush.bf16.msra.mxu0 %v153
    %168 = vmatmul.bf16.gmra.mxu0 %v158
    %v169 = vpop.f32.mrf.mxu0
    %v170 = vadd.f32 %v140, %v169
    %v171 = vpop.f32.mrf.mxu0
    %172 = vdwg.mxu0
    %v173 = vadd.f32 %v115, %v170
    %v174 = vld [vmem:[%s1] sm:$0xff]
    %176 = vset.pattern.permute.xlu0 0
    %177 = vperm.xlu0 %176, %v174
    %v178 = vpop.permute.xlu0 %177
    %v180 = vadd.f32 %v173, %v178
    %vm181 = vcmask 519168
    %v182 = vsel %vm181, %v180, -inf
    %v183 = vrot.slane %v182, 4
    %v184 = vmax.f32 %v182, %v183
    %v185 = vrot.slane %v184, 2
    %v186 = vmax.f32 %v184, %v185
    %v187 = vrot.slane %v186, 1
    %v188 = vmax.f32 %v186, %v187
    %vm189 = vcmask 523268
    %v190 = vsel %vm189, %v180, -inf
    %v191 = vrot.slane %v190, 4
    %v192 = vmax.f32 %v190, %v191
    %v193 = vrot.slane %v192, 2
    %v194 = vmax.f32 %v192, %v193
    %v195 = vrot.slane %v194, 1
    %v196 = vmax.f32 %v194, %v195
    %vm197 = vcmask 1040384
    %v198 = vsel %vm197, %v188, %v196
    %vm199 = vcmask 517120
    %200 = vst.msk [vmem:[#allocation7] sm:$0x3] %vm199, %v198
    // Predicated region
    $region42: #{tpu_custom_call.1} parent=1 // pred_check
      _
    $region43: #{tpu_custom_call.1} parent=1 // pred_check_branch
      %202 = sbr.rel (0) target = $region45
    $region44: #{tpu_custom_call.1} parent=1 // pred_region
      %204 = vsyncadd [#allocation4], 0
      %s206 = sshll.u32 [#allocation7], 4
      %s207 = int_to_ptr.vmem [resolvable:$true] %s206
      %s208 = sshll.u32 %s8, 4
      %s209 = int_to_ptr.hbm [resolvable:$true] %s208
      %211 = dma.vmem_to_hbm [thread:$0]  %s207, 32, %s209, [#allocation4]
    $region45: #{tpu_custom_call.1} parent=1 // pred_fallthru
      _
    // Predicated region
    $region46: #{tpu_custom_call.1} parent=1 // pred_check
      _
    $region47: #{tpu_custom_call.1} parent=1 // pred_check_branch
      %213 = sbr.rel (0) target = $region49
    $region48: #{tpu_custom_call.1} parent=1 // pred_region
      %215 = dma.done [#allocation4], 32
    $region49: #{tpu_custom_call.1} parent=1 // pred_fallthru
      _
    %216 = vsyncpa [#allocation3], 1
    %217 = vsyncpa [#allocation6], 1
    %218 = vsyncpa [#allocation4], 1

</llo_original>
